<compile_context>
chip_gen: v7x
topology: tpu7x:2x2x1
jax: 0.10.0
libtpu: 0.0.40
codegen_flags: <defaults>
</compile_context>

<pallas_src>
import functools

import jax
import jax.numpy as jnp
from jax import lax
from jax.experimental import pallas as pl
from jax.experimental.pallas import tpu as pltpu


def _round_up(x, m):
    return ((x + m - 1) // m) * m


def _sigmoid_loss_kernel(logits_ref, labels_ref, w_ref, out_ref, acc_ref, *, n_rows):
    i = pl.program_id(0)
    n_tiles = pl.num_programs(0)

    @pl.when(i == 0)
    def _init():
        acc_ref[...] = jnp.zeros_like(acc_ref)

    x = logits_ref[...].astype(jnp.float32)          # [TN, C] (cast in-register)
    labels = labels_ref[...]                         # [TN, 1] int32
    tn, c = x.shape

    class_ids = lax.broadcasted_iota(jnp.int32, (tn, c), 1)
    hit = class_ids == labels                        # one-hot mask [TN, C]

    # binary_cross_entropy_with_logits (reduction='none'), stable form:
    #   max(x,0) - x*y + log1p(exp(-|x|)),   x*y == where(hit, x, 0) for one-hot y
    bce = jnp.maximum(x, 0.0) - jnp.where(hit, x, 0.0) + jnp.log1p(jnp.exp(-jnp.abs(x)))

    # Mask padding rows of the (possibly partial) last tile.  Static check: only
    # emitted when N is not a multiple of the tile size.
    if n_rows % tn != 0:
        row_ids = i * tn + lax.broadcasted_iota(jnp.int32, (tn, 1), 0)
        bce = jnp.where(row_ids < n_rows, bce, 0.0)

    # Fold tile into the (8, C) accumulator: pure VPU adds (no XLU in the loop).
    acc_ref[...] += jnp.sum(bce.reshape(tn // 8, 8, c), axis=0)

    @pl.when(i == n_tiles - 1)
    def _finalize():
        w = w_ref[...].astype(jnp.float32)                     # [1, C]
        col = jnp.sum(acc_ref[...], axis=0, keepdims=True)     # [1, C]  (XLU, once)
        total = jnp.sum(col * w)                               # scalar  (XLU, once)
        out_ref[0, 0] = total / jnp.float32(n_rows)


def sigmoid_loss(pred_logits, targets, per_cls_weights, multihot_targets=False,
                 tile_rows=None):
    """Pallas TPU forward of SigmoidLoss.

    pred_logits: [N, C] float (any float dtype; pass native dtype, e.g. bf16)
    targets:     [N] int labels in [0, C)
    per_cls_weights: [C] floats
    """
    del multihot_targets  # single-label path, matching the reference forward()
    n, c = pred_logits.shape
    labels = targets.astype(jnp.int32).reshape(n, 1)
    weights = jnp.asarray(per_cls_weights, dtype=jnp.float32).reshape(1, c)

    itemsize = jnp.dtype(pred_logits.dtype).itemsize
    if tile_rows is None:
        # Keep a single logits tile around <=4 MiB (double-buffered -> <=8 MiB),
        # capped at 512 rows; multiple of 8 sublanes.
        bytes_per_row = max(c * itemsize, 1)
        tn = max(8, min(512, (4 * 1024 * 1024 // bytes_per_row) // 8 * 8))
    else:
        tn = max(8, _round_up(int(tile_rows), 8))
    tn = min(tn, _round_up(n, 8))
    num_tiles = pl.cdiv(n, tn)

    kernel = functools.partial(_sigmoid_loss_kernel, n_rows=n)

    cost = pl.CostEstimate(
        flops=10 * n * c,
        transcendentals=2 * n * c,
        bytes_accessed=n * c * itemsize + n * 4 + c * 4 + 4,
    )

    out = pl.pallas_call(
        kernel,
        out_shape=jax.ShapeDtypeStruct((1, 1), jnp.float32),
        grid=(num_tiles,),
        in_specs=[
            pl.BlockSpec((tn, c), lambda i: (i, 0)),   # logits tile
            pl.BlockSpec((tn, 1), lambda i: (i, 0)),   # labels tile
            pl.BlockSpec((1, c), lambda i: (0, 0)),    # per-class weights (resident)
        ],
        out_specs=pl.BlockSpec(memory_space=pltpu.MemorySpace.SMEM),
        scratch_shapes=[pltpu.VMEM((8, c), jnp.float32)],
        compiler_params=pltpu.CompilerParams(
            dimension_semantics=("arbitrary",),
            vmem_limit_bytes=32 * 1024 * 1024,
        ),
        cost_estimate=cost,
    )(pred_logits, labels, weights)
    return out[0, 0]


def _reference(pred_logits, targets, per_cls_weights):
    # Pure-JAX reference mirroring the PyTorch module.
    n, c = pred_logits.shape
    x = pred_logits.astype(jnp.float32)
    y = jax.nn.one_hot(targets, c, dtype=jnp.float32)
    bce = jnp.maximum(x, 0.0) - x * y + jnp.log1p(jnp.exp(-jnp.abs(x)))
    w = jnp.asarray(per_cls_weights, jnp.float32)[None, :]
    return jnp.sum(bce * w) / n


if __name__ == "__main__":
    key = jax.random.PRNGKey(0)
    k1, k2 = jax.random.split(key)

    N, C = 28, 16  # small batch (not a multiple of 8 -> exercises row masking)
    pred_logits = jax.random.normal(k1, (N, C), dtype=jnp.float32)
    targets = jax.random.randint(k2, (N,), 0, C, dtype=jnp.int32)
    per_cls_weights = jnp.linspace(0.5, 1.5, C, dtype=jnp.float32)

    ref = _reference(pred_logits, targets, per_cls_weights)

    # Default tiling (single partial tile here).
    out1 = jax.block_until_ready(sigmoid_loss(pred_logits, targets, per_cls_weights))
    # Forced small tile -> multi-step grid, exercises init/accumulate/finalize.
    out2 = jax.block_until_ready(
        sigmoid_loss(pred_logits, targets, per_cls_weights, tile_rows=8))

    assert jnp.allclose(out1, ref, rtol=1e-5, atol=1e-5), (out1, ref)
    assert jnp.allclose(out2, ref, rtol=1e-5, atol=1e-5), (out2, ref)

    print("KERNEL_OK")
</pallas_src>

<mosaic_0001>
module attributes {stable_mosaic.version = 11 : i64} {
  func.func @_sigmoid_loss_kernel(%arg0: i32, %arg1: memref<32x16xf32, #tpu.memory_space<vmem>>, %arg2: memref<32x1xi32, #tpu.memory_space<vmem>>, %arg3: memref<1x16xf32, #tpu.memory_space<vmem>>, %arg4: memref<1x1xf32, #tpu.memory_space<smem>>, %arg5: memref<8x16xf32, #tpu.memory_space<vmem>>) attributes {dimension_semantics = [#tpu.dimension_semantics<arbitrary>], iteration_bounds = array<i64: 1>, scalar_prefetch = 0 : i64, scratch_operands = 1 : i64, tpu.core_type = #tpu.core_type<tc>, window_params = [{transform_indices = @transform_0, window_bounds = array<i64: 32, 16>}, {transform_indices = @transform_1, window_bounds = array<i64: 32, 1>}, {pipeline_mode = #tpu.pipeline_mode<synchronous>, transform_indices = @transform_2, window_bounds = array<i64: 1, 16>}, {transform_indices = @transform_3, window_bounds = array<i64: 1, 1>}]} {
    %c0_i32 = arith.constant 0 : i32
    %0 = arith.cmpi eq, %arg0, %c0_i32 : i32
    %1 = arith.extui %0 : i1 to i32
    %c0_i32_0 = arith.constant 0 : i32
    %2 = arith.cmpi ne, %1, %c0_i32_0 : i32
    scf.if %2 {
      %cst_14 = arith.constant 0.000000e+00 : f32
      %37 = vector.broadcast %cst_14 : f32 to vector<8x16xf32>
      %c0_15 = arith.constant 0 : index
      %c0_16 = arith.constant 0 : index
      %38 = vector.load %arg5[%c0_15, %c0_16] : memref<8x16xf32, #tpu.memory_space<vmem>>, vector<8x16xf32>
      tpu.vector_store %arg5[%c0_15, %c0_16], %37 {strides = array<i32>} : memref<8x16xf32, #tpu.memory_space<vmem>>, vector<8x16xf32>,
    } else {
    }
    %c0 = arith.constant 0 : index
    %c0_1 = arith.constant 0 : index
    %3 = vector.load %arg1[%c0, %c0_1] : memref<32x16xf32, #tpu.memory_space<vmem>>, vector<32x16xf32>
    %c0_2 = arith.constant 0 : index
    %c0_3 = arith.constant 0 : index
    %4 = vector.load %arg2[%c0_2, %c0_3] : memref<32x1xi32, #tpu.memory_space<vmem>>, vector<32x1xi32>
    %5 = tpu.iota {dimensions = array<i32: 1>} : vector<32x16xi32>
    %6 = vector.broadcast %4 : vector<32x1xi32> to vector<32x16xi32>
    %7 = arith.cmpi eq, %5, %6 : vector<32x16xi32>
    %cst = arith.constant 0.000000e+00 : f32
    %8 = vector.broadcast %cst : f32 to vector<32x16xf32>
    %9 = arith.maximumf %3, %8 : vector<32x16xf32>
    %cst_4 = arith.constant 0.000000e+00 : f32
    %10 = vector.broadcast %cst_4 : f32 to vector<32x16xf32>
    %11 = arith.select %7, %3, %10 : vector<32x16xi1>, vector<32x16xf32>
    %12 = arith.subf %9, %11 : vector<32x16xf32>
    %13 = math.absf %3 : vector<32x16xf32>
    %cst_5 = arith.constant 0.000000e+00 : f32
    %14 = vector.broadcast %cst_5 : f32 to vector<32x16xf32>
    %15 = arith.subf %14, %13 : vector<32x16xf32>
    %16 = math.exp %15 : vector<32x16xf32>
    %17 = math.log1p %16 : vector<32x16xf32>
    %18 = arith.addf %12, %17 : vector<32x16xf32>
    %c32_i32 = arith.constant 32 : i32
    %19 = arith.muli %arg0, %c32_i32 : i32
    %20 = tpu.iota {dimensions = array<i32: 0>} : vector<32x1xi32>
    %21 = vector.broadcast %19 : i32 to vector<32x1xi32>
    %22 = arith.addi %21, %20 : vector<32x1xi32>
    %c28_i32 = arith.constant 28 : i32
    %23 = vector.broadcast %c28_i32 : i32 to vector<32x1xi32>
    %24 = arith.cmpi slt, %22, %23 : vector<32x1xi32>
    %cst_6 = arith.constant 0.000000e+00 : f32
    %25 = vector.shape_cast %24 : vector<32x1xi1> to vector<32x1xi1>
    %26 = vector.broadcast %25 : vector<32x1xi1> to vector<32x16xi1>
    %27 = vector.broadcast %cst_6 : f32 to vector<32x16xf32>
    %28 = arith.select %26, %18, %27 : vector<32x16xi1>, vector<32x16xf32>
    %c0_7 = arith.constant 0 : index
    %c0_8 = arith.constant 0 : index
    %29 = vector.load %arg5[%c0_7, %c0_8] : memref<8x16xf32, #tpu.memory_space<vmem>>, vector<8x16xf32>
    %30 = vector.shape_cast %28 : vector<32x16xf32> to vector<4x8x16xf32>
    %cst_9 = arith.constant dense<0.000000e+00> : vector<8x16xf32>
    %31 = vector.multi_reduction <add>, %30, %cst_9 [0] : vector<4x8x16xf32> to vector<8x16xf32>
    %32 = arith.addf %29, %31 : vector<8x16xf32>
    %c0_10 = arith.constant 0 : index
    %c0_11 = arith.constant 0 : index
    %33 = vector.load %arg5[%c0_10, %c0_11] : memref<8x16xf32, #tpu.memory_space<vmem>>, vector<8x16xf32>
    tpu.vector_store %arg5[%c0_10, %c0_11], %32 {strides = array<i32>} : memref<8x16xf32, #tpu.memory_space<vmem>>, vector<8x16xf32>,
    %c0_i32_12 = arith.constant 0 : i32
    %34 = arith.cmpi eq, %arg0, %c0_i32_12 : i32
    %35 = arith.extui %34 : i1 to i32
    %c0_i32_13 = arith.constant 0 : i32
    %36 = arith.cmpi ne, %35, %c0_i32_13 : i32
    scf.if %36 {
      %c0_14 = arith.constant 0 : index
      %c0_15 = arith.constant 0 : index
      %37 = vector.load %arg3[%c0_14, %c0_15] : memref<1x16xf32, #tpu.memory_space<vmem>>, vector<1x16xf32>
      %c0_16 = arith.constant 0 : index
      %c0_17 = arith.constant 0 : index
      %38 = vector.load %arg5[%c0_16, %c0_17] : memref<8x16xf32, #tpu.memory_space<vmem>>, vector<8x16xf32>
      %cst_18 = arith.constant dense<0.000000e+00> : vector<16xf32>
      %39 = vector.multi_reduction <add>, %38, %cst_18 [0] : vector<8x16xf32> to vector<16xf32>
      %40 = vector.shape_cast %39 : vector<16xf32> to vector<1x16xf32>
      %41 = arith.mulf %40, %37 : vector<1x16xf32>
      %42 = vector.shape_cast %41 : vector<1x16xf32> to vector<1x1x16xf32>
      %cst_19 = arith.constant dense<0.000000e+00> : vector<1xf32>
      %43 = vector.multi_reduction <add>, %42, %cst_19 [1, 2] : vector<1x1x16xf32> to vector<1xf32>
      %44 = vector.shape_cast %43 : vector<1xf32> to vector<1x1x1xf32>
      %45 = vector.extract %44[0, 0, 0] : f32 from vector<1x1x1xf32>
      %cst_20 = arith.constant 2.800000e+01 : f32
      %46 = arith.divf %45, %cst_20 : f32
      %c0_21 = arith.constant 0 : index
      %c0_22 = arith.constant 0 : index
      %47 = memref.load %arg4[%c0_21, %c0_22] : memref<1x1xf32, #tpu.memory_space<smem>>
      memref.store %46, %arg4[%c0_21, %c0_22] : memref<1x1xf32, #tpu.memory_space<smem>>
    } else {
    }
    return
  }
  func.func @transform_0(%arg0: i32) -> (i32, i32) {
    %c0_i32 = arith.constant 0 : i32
    %c0_i32_0 = arith.constant 0 : i32
    return %arg0, %c0_i32 : i32, i32
  }
  func.func @transform_1(%arg0: i32) -> (i32, i32) {
    %c0_i32 = arith.constant 0 : i32
    %c0_i32_0 = arith.constant 0 : i32
    return %arg0, %c0_i32 : i32, i32
  }
  func.func @transform_2(%arg0: i32) -> (i32, i32) {
    %c0_i32 = arith.constant 0 : i32
    %c0_i32_0 = arith.constant 0 : i32
    %c0_i32_1 = arith.constant 0 : i32
    return %c0_i32, %c0_i32_0 : i32, i32
  }
  func.func @transform_3(%arg0: i32) -> (i32, i32) {
    %c0_i32 = arith.constant 0 : i32
    %c0_i32_0 = arith.constant 0 : i32
    %c0_i32_1 = arith.constant 0 : i32
    return %c0_i32, %c0_i32_0 : i32, i32
  }
}

</mosaic_0001>

<llo_original>
// kernel: tpu_custom_call.1
$region0: #{tpu_custom_call.1}
  #allocation0 [shape = 'u32[]', space=smem, size = 0x4, offset = 0x4, fixed_abs, tag = 'smem constant byte address 0x4 - core index']
  #allocation1 [shape = 'u32[144,128]{1,0:T(1,128)}', space=vmem, size = 0x12000, scoped, tag = 'internal scratch']
  #allocation2 [shape = 'f32[8,16]{1,0:T(8,128)}', space=vmem, size = 0x1000, scoped, tag = 'scratch operand']
  %s0 = inlined_call_operand.vmem [shape: f32[28,16], index: 0, kind: input, shape index: {}]
  %s1 = inlined_call_operand.vmem [shape: s32[28,1], index: 1, kind: input, shape index: {}]
  %s2 = inlined_call_operand.vmem [shape: f32[1,16], index: 2, kind: input, shape index: {}]
  %s3 = inlined_call_operand.hbm [shape: f32[1,1], index: 3, kind: output, shape index: {}]
  %s4 = sld [smem:[#allocation0]]
  $region30: #{tpu_custom_call.1} parent=0
    _
  %s6 = ssub.s32 1, %s4
  %s7 = scalar_select 0, %s6, %s4
  $region1: #{tpu_custom_call.1} parent=0
    #allocation3 [shape = 'u8[512]{0}', space=smem, size = 0x200, scoped, tag = 'output window, operand 0, single buffered']
    #allocation4 [shape = 's32[1]{0}', space=sflag, size = 0x4, scoped, tag = 'scoped memory for tpu_custom_call.1']
    %8 = vsyncpa [#allocation4], 0
    // Predicated region
    $region2: #{tpu_custom_call.1} parent=1 // pred_check
      _
    $region3: #{tpu_custom_call.1} parent=1 // pred_check_branch
      %10 = sbr.rel (0) target = $region5
    $region4: #{tpu_custom_call.1} parent=1 // pred_region
      _
    $region5: #{tpu_custom_call.1} parent=1 // pred_fallthru
      _
    // Predicated region
    $region6: #{tpu_custom_call.1} parent=1 // pred_check
      _
    $region7: #{tpu_custom_call.1} parent=1 // pred_check_branch
      %12 = sbr.rel (0) target = $region9
    $region8: #{tpu_custom_call.1} parent=1 // pred_region
      _
    $region9: #{tpu_custom_call.1} parent=1 // pred_fallthru
      _
    // Predicated region
    $region10: #{tpu_custom_call.1} parent=1 // pred_check
      _
    $region11: #{tpu_custom_call.1} parent=1 // pred_check_branch
      %14 = sbr.rel (0) target = $region13
    $region12: #{tpu_custom_call.1} parent=1 // pred_region
      _
    $region13: #{tpu_custom_call.1} parent=1 // pred_fallthru
      _
    %p15 = scmp.eq.s32.totalorder 0, 0
    // Predicated region
    $region14: #{tpu_custom_call.1} parent=1 // pred_check
      %p16 = pneg %p15
    $region15: #{tpu_custom_call.1} parent=1 // pred_check_branch
      %18 = sbr.rel (%p16) target = $region17
    $region16: #{tpu_custom_call.1} parent=1 // pred_region
      %vm19 = vcmask 130048
      %20 = vst.msk [vmem:[#allocation2] sm:$0xff] %vm19, 0.0
    $region17: #{tpu_custom_call.1} parent=1 // pred_fallthru
      _
    %v21 = vld [vmem:[%s0] sm:$0xff]
    %v22 = vld [vmem:[%s0 + $0x8] sm:$0xff]
    %v23 = vld [vmem:[%s0 + $0x10] sm:$0xff]
    %v24 = vld [vmem:[%s0 + $0x18] sm:$0xff]
    %v25 = vld [vmem:[%s1] sm:$0xff]
    %v26 = vld [vmem:[%s1 + $0x8] sm:$0xff]
    %v27 = vld [vmem:[%s1 + $0x10] sm:$0xff]
    %v28 = vld [vmem:[%s1 + $0x18] sm:$0xff]
    %v29 = vlaneseq
    %v30 = vand.u32 %v29, 127
    %31 = vset.pattern.permute.xlu0 0
    %32 = vperm.xlu0 %31, %v25
    %v33 = vpop.permute.xlu0 %32
    %34 = vset.pattern.permute.xlu0 0
    %35 = vperm.xlu0 %34, %v26
    %v36 = vpop.permute.xlu0 %35
    %37 = vset.pattern.permute.xlu0 0
    %38 = vperm.xlu0 %37, %v27
    %v39 = vpop.permute.xlu0 %38
    %40 = vset.pattern.permute.xlu0 0
    %41 = vperm.xlu0 %40, %v28
    %v42 = vpop.permute.xlu0 %41
    %vm43 = vcmp.eq.s32.totalorder %v30, %v33
    %vm44 = vcmp.eq.s32.totalorder %v30, %v36
    %vm45 = vcmp.eq.s32.totalorder %v30, %v39
    %vm46 = vcmp.eq.s32.totalorder %v30, %v42
    %v47 = vmax.f32 %v21, 0.0
    %v48 = vmax.f32 %v22, 0.0
    %v49 = vmax.f32 %v23, 0.0
    %v50 = vmax.f32 %v24, 0.0
    %v51 = vsel %vm43, %v21, 0.0
    %v52 = vsel %vm44, %v22, 0.0
    %v53 = vsel %vm45, %v23, 0.0
    %v54 = vsel %vm46, %v24, 0.0
    %v55 = vsub.f32 %v47, %v51
    %v56 = vsub.f32 %v48, %v52
    %v57 = vsub.f32 %v49, %v53
    %v58 = vsub.f32 %v50, %v54
    %v59 = vand.u32 2147483647, %v21
    %v60 = vand.u32 2147483647, %v22
    %v61 = vand.u32 2147483647, %v23
    %v62 = vand.u32 2147483647, %v24
    %v63 = vsub.f32 0.0, %v59
    %v64 = vsub.f32 0.0, %v60
    %v65 = vsub.f32 0.0, %v61
    %v66 = vsub.f32 0.0, %v62
    %v67 = vmul.f32 %v63, 1.442695
    %v68 = vpow.pop %v67
    %v69 = vmul.f32 %v64, 1.442695
    %v70 = vpow.pop %v69
    %v71 = vmul.f32 %v65, 1.442695
    %v72 = vpow.pop %v71
    %v73 = vmul.f32 %v66, 1.442695
    %v74 = vpow.pop %v73
    %v75 = vadd.f32 %v68, 1.0
    %v76 = vlog2.pop %v75
    %v77 = vmul.f32 %v76, 0.6931472
    %v78 = vmul.f32 -0.5, %v68
    %v79 = vadd.f32 %v78, 1.0
    %v80 = vmul.f32 %v79, %v68
    %v81 = vand.u32 2147483647, %v68
    %vm82 = vcmp.lt.f32.partialorder %v81, 0.0004427343
    %v83 = vsel %vm82, %v80, %v77
    %v84 = vadd.f32 %v70, 1.0
    %v85 = vlog2.pop %v84
    %v86 = vmul.f32 %v85, 0.6931472
    %v87 = vmul.f32 -0.5, %v70
    %v88 = vadd.f32 %v87, 1.0
    %v89 = vmul.f32 %v88, %v70
    %v90 = vand.u32 2147483647, %v70
    %vm91 = vcmp.lt.f32.partialorder %v90, 0.0004427343
    %v92 = vsel %vm91, %v89, %v86
    %v93 = vadd.f32 %v72, 1.0
    %v94 = vlog2.pop %v93
    %v95 = vmul.f32 %v94, 0.6931472
    %v96 = vmul.f32 -0.5, %v72
    %v97 = vadd.f32 %v96, 1.0
    %v98 = vmul.f32 %v97, %v72
    %v99 = vand.u32 2147483647, %v72
    %vm100 = vcmp.lt.f32.partialorder %v99, 0.0004427343
    %v101 = vsel %vm100, %v98, %v95
    %v102 = vadd.f32 %v74, 1.0
    %v103 = vlog2.pop %v102
    %v104 = vmul.f32 %v103, 0.6931472
    %v105 = vmul.f32 -0.5, %v74
    %v106 = vadd.f32 %v105, 1.0
    %v107 = vmul.f32 %v106, %v74
    %v108 = vand.u32 2147483647, %v74
    %vm109 = vcmp.lt.f32.partialorder %v108, 0.0004427343
    %v110 = vsel %vm109, %v107, %v104
    %v111 = vadd.f32 %v55, %v83
    %v112 = vadd.f32 %v56, %v92
    %v113 = vadd.f32 %v57, %v101
    %v114 = vadd.f32 %v58, %v110
    %s115 = smul.u32 0, 32
    %v116 = vlaneseq
    %v117 = vshrl.u32 %v116, 7
    %v118 = vadd.s32 %v117, 8
    %v119 = vadd.s32 %v117, 16
    %v120 = vadd.s32 %v117, 24
    %v121 = vstv %s115
    %v122 = vadd.s32 %v121, %v117
    %v123 = vadd.s32 %v121, %v118
    %v124 = vadd.s32 %v121, %v119
    %v125 = vadd.s32 %v121, %v120
    %vm126 = vcmp.lt.s32.totalorder %v122, 28
    %vm127 = vcmp.lt.s32.totalorder %v123, 28
    %vm128 = vcmp.lt.s32.totalorder %v124, 28
    %vm129 = vcmp.lt.s32.totalorder %v125, 28
    %v130 = vsel %vm126, 1, 0
    %v131 = vsel %vm127, 1, 0
    %v132 = vsel %vm128, 1, 0
    %v133 = vsel %vm129, 1, 0
    %vm134 = vcmp.eq.s32.totalorder %v130, 1
    %vm135 = vcmp.eq.s32.totalorder %v131, 1
    %vm136 = vcmp.eq.s32.totalorder %v132, 1
    %vm137 = vcmp.eq.s32.totalorder %v133, 1
    %v138 = vsel %vm134, %v111, 0.0
    %v139 = vsel %vm135, %v112, 0.0
    %v140 = vsel %vm136, %v113, 0.0
    %v141 = vsel %vm137, %v114, 0.0
    %v142 = vld [vmem:[#allocation2] sm:$0xff]
    %vm143 = vcmask 130048
    %v144 = vsel %vm143, %v138, 0.0
    %v145 = vsel %vm143, %v139, 0.0
    %v146 = vadd.f32 %v144, %v145
    %v147 = vsel %vm143, %v140, 0.0
    %v148 = vadd.f32 %v146, %v147
    %v149 = vsel %vm143, %v141, 0.0
    %v150 = vadd.f32 %v148, %v149
    %v151 = vadd.f32 %v142, %v150
    %152 = vst.msk [vmem:[#allocation2] sm:$0xff] %vm143, %v151
    // Predicated region
    $region18: #{tpu_custom_call.1} parent=1 // pred_check
      %p153 = pneg %p15
    $region19: #{tpu_custom_call.1} parent=1 // pred_check_branch
      %155 = sbr.rel (%p153) target = $region21
    $region20: #{tpu_custom_call.1} parent=1 // pred_region
      %v156 = vld [vmem:[%s2] sm:$0x1]
      %v157 = vld [vmem:[#allocation2] sm:$0xff]
      %v158 = vsel %vm143, %v157, 0.0
      %v159 = vrot.slane %v158, 4
      %v160 = vadd.f32 %v158, %v159
      %v161 = vrot.slane %v160, 2
      %v162 = vadd.f32 %v160, %v161
      %v163 = vrot.slane %v162, 1
      %v164 = vadd.f32 %v162, %v163
      %v165 = vmul.f32 %v164, %v156
      %vm166 = vcmask 122880
      %v167 = vsel %vm166, %v165, 0.0
      %168 = vadd.xlane.f32.xlu0 %v167
      %v169 = vpop.xlane.xlu0 %168
      %v170 = vrot.slane %v169, 4
      %v171 = vadd.f32 %v169, %v170
      %v172 = vrot.slane %v171, 2
      %v173 = vadd.f32 %v171, %v172
      %v174 = vrot.slane %v173, 1
      %v175 = vadd.f32 %v173, %v174
      %s176 = vtos %v175
      %v177 = vrcp.pop 28.0
      %s178 = vtos %v177
      %s179 = smul.f32 %s176, %s178
      %s180 = scalar_lea.smem [#allocation3], 0
      %181 = sst [smem:[%s180]] %s179
    $region21: #{tpu_custom_call.1} parent=1 // pred_fallthru
      _
    // Predicated region
    $region22: #{tpu_custom_call.1} parent=1 // pred_check
      _
    $region23: #{tpu_custom_call.1} parent=1 // pred_check_branch
      %183 = sbr.rel (0) target = $region25
    $region24: #{tpu_custom_call.1} parent=1 // pred_region
      %s185 = ssub.s32 16, 16
      %186 = vsyncadd [#allocation4], %s185
      %189 = dma.smem_to_hbm [#allocation3], 16, %s3, [#allocation4]
    $region25: #{tpu_custom_call.1} parent=1 // pred_fallthru
      _
    // Predicated region
    $region26: #{tpu_custom_call.1} parent=1 // pred_check
      _
    $region27: #{tpu_custom_call.1} parent=1 // pred_check_branch
      %191 = sbr.rel (0) target = $region29
    $region28: #{tpu_custom_call.1} parent=1 // pred_region
      %192 = dma.done [#allocation4], 16
    $region29: #{tpu_custom_call.1} parent=1 // pred_fallthru
      _
    %193 = sfence
    %194 = vsyncpa [#allocation4], 1

</llo_original>
